<compile_context>
chip_gen: v6e
topology: v6e:2x2x1
jax: 0.10.0
libtpu: 0.0.40
codegen_flags: <defaults>
</compile_context>

<pallas_src>
import functools

import numpy as np
import jax
import jax.numpy as jnp
from jax.experimental import pallas as pl
from jax.experimental.pallas import tpu as pltpu


def _round_up(x, m):
    return ((x + m - 1) // m) * m


@functools.lru_cache(maxsize=1)
def _vmem_capacity_bytes():
    """Physical VMEM per TensorCore; conservative 64 MiB fallback (v7x)."""
    try:
        info = pltpu.get_tpu_info()
        for name in ("vmem_capacity_bytes", "vmem_size_bytes", "vmem_bytes"):
            v = getattr(info, name, None)
            if v:
                return int(v)
    except Exception:
        pass
    return 64 * 1024 * 1024


# ----------------------------------------------------------------------------
# Kernels
# ----------------------------------------------------------------------------
def _net_eot_kernel(x_ref, w1_ref, b1_ref, w2_ref, b2_ref, o_ref):
    """Shallow path: relu(x @ W1 + b1) @ W2pad + b2pad -> lane-dense (bb,128)."""
    h = jnp.dot(x_ref[...], w1_ref[...], preferred_element_type=jnp.float32)
    h = jnp.maximum(h + b1_ref[...], 0.0)
    y = jnp.dot(h.astype(w2_ref.dtype), w2_ref[...],
                preferred_element_type=jnp.float32) + b2_ref[...]
    o_ref[...] = y.astype(o_ref.dtype)


def _net_eot_deeper_kernel(x_ref, w1_ref, b1_ref, w2_ref, b2_ref, w3_ref,
                           b3_ref, o_ref, h1_ref, acc_ref):
    """Deeper path on grid (batch tile i, hidden-column tile j).

    j == 0:  compute h1 = relu(x @ W1 + b1) once per batch tile, cache in VMEM,
             zero the f32 accumulator.
    each j:  h2_j = relu(h1 @ W2[:, j-tile] + b2[j-tile]);
             acc += h2_j @ W3pad[j-tile]   (W3 padded to 128 lanes).
    last j:  write acc + b3pad to the lane-dense (bb, 128) output block.
    """
    j = pl.program_id(1)

    @pl.when(j == 0)
    def _():
        h1 = jnp.dot(x_ref[...], w1_ref[...], preferred_element_type=jnp.float32)
        h1_ref[...] = jnp.maximum(h1 + b1_ref[...], 0.0).astype(h1_ref.dtype)
        acc_ref[...] = jnp.zeros_like(acc_ref)

    h2 = jnp.dot(h1_ref[...], w2_ref[...], preferred_element_type=jnp.float32)
    h2 = jnp.maximum(h2 + b2_ref[...], 0.0)
    acc_ref[...] += jnp.dot(h2.astype(w3_ref.dtype), w3_ref[...],
                            preferred_element_type=jnp.float32)

    @pl.when(j == pl.num_programs(1) - 1)
    def _():
        o_ref[...] = (acc_ref[...] + b3_ref[...]).astype(o_ref.dtype)


# ----------------------------------------------------------------------------
# VMEM budgeting helpers (estimates include double-buffered pipeline inputs)
# ----------------------------------------------------------------------------
def _shallow_vmem_need(bb, dim_p, H_p, wsz, osz):
    need = 2 * bb * dim_p * wsz          # x tile
    need += 2 * dim_p * H_p * wsz        # W1
    need += 2 * H_p * 4                  # b1 (f32)
    need += 2 * H_p * 128 * wsz          # W2 padded to 128 cols
    need += 2 * 128 * 4                  # b2
    need += 2 * bb * 128 * osz           # out tile
    need += 2 * bb * H_p * 4             # f32 activation headroom
    return need


def _deeper_vmem_need(bb, tn, dim_p, H_p, wsz, osz):
    need = 2 * bb * dim_p * wsz          # x tile
    need += 2 * dim_p * H_p * wsz        # W1
    need += 2 * H_p * 4                  # b1
    need += 2 * H_p * tn * wsz           # W2 column tile
    need += 2 * tn * 4                   # b2 tile
    need += 2 * tn * 128 * wsz           # W3 tile padded to 128 cols
    need += 2 * 128 * 4                  # b3
    need += 2 * bb * 128 * osz           # out tile
    need += bb * H_p * wsz               # h1 scratch
    need += bb * 128 * 4                 # acc scratch
    need += 2 * bb * tn * 4              # h2 intermediate headroom
    return need


def _pick_tn(H_p, target):
    """Largest multiple of 128 that divides H_p and is <= target."""
    m = H_p // 128
    best = 128
    for k in range(1, m + 1):
        if m % k == 0 and k * 128 <= target:
            best = k * 128
    return best


# ----------------------------------------------------------------------------
# Parameter preparation (pad/cast ONCE, outside the per-call forward)
# ----------------------------------------------------------------------------
def prepare_net_eot_params(params, compute_dtype=jnp.bfloat16):
    """Pad weights/biases to lane-aligned shapes and cast weights to the MXU
    compute dtype.  Biases stay float32 (accumulation is always float32).
    Zero padding is exact: padded rows/cols contribute nothing."""
    cdt = np.dtype(compute_dtype)
    acc = jnp.float32
    deeper = "w3" in params
    dim, H = params["w1"].shape
    dim_p, H_p = _round_up(dim, 128), _round_up(H, 128)

    out = {}
    out["w1"] = jnp.zeros((dim_p, H_p), cdt).at[:dim, :H].set(
        params["w1"].astype(cdt))
    out["b1"] = jnp.zeros((1, H_p), acc).at[:, :H].set(
        params["b1"].reshape(1, -1).astype(acc))
    if deeper:
        out["w2"] = jnp.zeros((H_p, H_p), cdt).at[:H, :H].set(
            params["w2"].astype(cdt))
        out["b2"] = jnp.zeros((1, H_p), acc).at[:, :H].set(
            params["b2"].reshape(1, -1).astype(acc))
        out["w3"] = jnp.zeros((H_p, 128), cdt).at[:H, :1].set(
            params["w3"].reshape(-1, 1).astype(cdt))
        out["b3"] = jnp.zeros((1, 128), acc).at[:, :1].set(
            params["b3"].reshape(1, 1).astype(acc))
    else:
        out["w2"] = jnp.zeros((H_p, 128), cdt).at[:H, :1].set(
            params["w2"].reshape(-1, 1).astype(cdt))
        out["b2"] = jnp.zeros((1, 128), acc).at[:, :1].set(
            params["b2"].reshape(1, 1).astype(acc))
    return out


# ----------------------------------------------------------------------------
# Forward
# ----------------------------------------------------------------------------
@functools.partial(jax.jit, static_argnames=("block_b",))
def net_eot_forward(x, padded_params, *, block_b=2048):
    """Forward pass of Net_EOT.  `padded_params` comes from
    prepare_net_eot_params (weights [in,out], pre-padded, pre-cast)."""
    B, dim = x.shape
    out_dtype = x.dtype
    deeper = "w3" in padded_params

    w1 = padded_params["w1"]
    b1 = padded_params["b1"]
    w2 = padded_params["w2"]
    b2 = padded_params["b2"]
    dim_p, H_p = w1.shape
    cdt = w1.dtype
    wsz = np.dtype(cdt).itemsize
    osz = np.dtype(out_dtype).itemsize
    if dim > dim_p:
        raise ValueError("x feature dim exceeds padded weight dim")

    vmem_cap = _vmem_capacity_bytes()
    budget = int(0.80 * vmem_cap)

    # Batch tile: multiple of 128, big enough to amortize per-step overhead,
    # clamped so the "parallel" axis has >=2 tiles (v7x megacore split).
    bb = max(128, min(_round_up(block_b, 128), _round_up(B, 128)))
    if B > 128:
        bb = max(128, min(bb, _round_up(pl.cdiv(B, 2), 128)))

    if deeper:
        w3 = padded_params["w3"]
        b3 = padded_params["b3"]
        tn_target = 512
        tn = _pick_tn(H_p, tn_target)
        for _ in range(32):
            if _deeper_vmem_need(bb, tn, dim_p, H_p, wsz, osz) <= budget:
                break
            if tn > 256:
                tn_target = max(128, tn_target // 2)
                tn = _pick_tn(H_p, tn_target)
            elif bb > 256:
                bb = max(256, (bb // 2) // 128 * 128)
            elif tn > 128:
                tn_target, tn = 128, 128
            elif bb > 128:
                bb = 128
            else:
                break
        # TODO(synk): for extreme hidden sizes where even (bb=128, tn=128)
        # exceeds VMEM, additionally tile the W1 / h1 hidden dimension.
        vmem_need = _deeper_vmem_need(bb, tn, dim_p, H_p, wsz, osz)
    else:
        for _ in range(32):
            if _shallow_vmem_need(bb, dim_p, H_p, wsz, osz) <= budget or bb <= 128:
                break
            bb = max(128, (bb // 2) // 128 * 128)
        vmem_need = _shallow_vmem_need(bb, dim_p, H_p, wsz, osz)

    num_blocks = pl.cdiv(B, bb)
    B_p = num_blocks * bb

    # Per-call padding/cast of the activations only (weights are pre-padded).
    if B_p == B and dim_p == dim and x.dtype == cdt:
        xp = x
    else:
        xp = jnp.zeros((B_p, dim_p), cdt).at[:B, :dim].set(x.astype(cdt))

    # Scoped-VMEM limit derived from the real per-core capacity (with headroom)
    # instead of a fixed constant; always above the per-generation defaults.
    vmem_limit = int(min(int(0.90 * vmem_cap),
                         max(vmem_need + (16 << 20), 32 << 20)))

    if deeper:
        num_j = H_p // tn
        grid = (num_blocks, num_j)
        in_specs = [
            pl.BlockSpec((bb, dim_p), lambda i, j: (i, 0)),
            pl.BlockSpec((dim_p, H_p), lambda i, j: (0, 0)),
            pl.BlockSpec((1, H_p), lambda i, j: (0, 0)),
            pl.BlockSpec((H_p, tn), lambda i, j: (0, j)),
            pl.BlockSpec((1, tn), lambda i, j: (0, j)),
            pl.BlockSpec((tn, 128), lambda i, j: (j, 0)),
            pl.BlockSpec((1, 128), lambda i, j: (0, 0)),
        ]
        out_spec = pl.BlockSpec((bb, 128), lambda i, j: (i, 0))
        scratch = [pltpu.VMEM((bb, H_p), cdt),
                   pltpu.VMEM((bb, 128), jnp.float32)]
        args = (xp, w1, b1, w2, b2, w3, b3)
        kernel = _net_eot_deeper_kernel
        semantics = ("parallel", "arbitrary")
        flops = 2 * B_p * (dim_p * H_p + H_p * H_p + H_p * 128)
        bytes_accessed = (int(xp.size) * wsz + int(w1.size) * wsz
                          + int(b1.size) * 4
                          + num_blocks * (int(w2.size) * wsz
                                          + int(b2.size) * 4
                                          + int(w3.size) * wsz)
                          + int(b3.size) * 4 + B_p * 128 * osz)
    else:
        grid = (num_blocks,)
        in_specs = [
            pl.BlockSpec((bb, dim_p), lambda i: (i, 0)),
            pl.BlockSpec((dim_p, H_p), lambda i: (0, 0)),
            pl.BlockSpec((1, H_p), lambda i: (0, 0)),
            pl.BlockSpec((H_p, 128), lambda i: (0, 0)),
            pl.BlockSpec((1, 128), lambda i: (0, 0)),
        ]
        out_spec = pl.BlockSpec((bb, 128), lambda i: (i, 0))
        scratch = []
        args = (xp, w1, b1, w2, b2)
        kernel = _net_eot_kernel
        semantics = ("parallel",)
        flops = 2 * B_p * (dim_p * H_p + H_p * 128)
        bytes_accessed = (int(xp.size) * wsz + int(w1.size) * wsz
                          + int(b1.size) * 4 + int(w2.size) * wsz
                          + int(b2.size) * 4 + B_p * 128 * osz)

    cost = pl.CostEstimate(flops=int(flops), transcendentals=0,
                           bytes_accessed=int(bytes_accessed))

    out = pl.pallas_call(
        kernel,
        out_shape=jax.ShapeDtypeStruct((B_p, 128), out_dtype),
        grid_spec=pltpu.PrefetchScalarGridSpec(
            num_scalar_prefetch=0,
            grid=grid,
            in_specs=in_specs,
            out_specs=out_spec,
            scratch_shapes=scratch,
        ),
        compiler_params=pltpu.CompilerParams(
            dimension_semantics=semantics,
            vmem_limit_bytes=vmem_limit,
        ),
        cost_estimate=cost,
    )(*args)

    # Column 0 of the lane-dense output block holds the real fc-out value.
    return out[:B, :1]


# ----------------------------------------------------------------------------
# Deterministic parameter init (mimics nn.Linear: U(-1/sqrt(fan_in), +...))
# ----------------------------------------------------------------------------
def init_net_eot_params(key, dim, K, deeper=False, dtype=jnp.float32):
    def linear(key, fan_in, fan_out):
        kw, kb = jax.random.split(key)
        bound = float(1.0 / np.sqrt(fan_in))
        w = jax.random.uniform(kw, (fan_in, fan_out), dtype, -bound, bound)
        b = jax.random.uniform(kb, (1, fan_out), dtype, -bound, bound)
        return w, b

    if deeper:
        k1, k2, k3 = jax.random.split(key, 3)
        w1, b1 = linear(k1, dim, 10 * K)
        w2, b2 = linear(k2, 10 * K, 10 * K)
        w3, b3 = linear(k3, 10 * K, 1)
        return {"w1": w1, "b1": b1, "w2": w2, "b2": b2, "w3": w3, "b3": b3}
    else:
        k1, k2 = jax.random.split(key)
        w1, b1 = linear(k1, dim, K)
        w2, b2 = linear(k2, K, 1)
        return {"w1": w1, "b1": b1, "w2": w2, "b2": b2}


def net_eot_reference(x, params):
    """Pure-JAX reference for correctness check."""
    h = jnp.maximum(x @ params["w1"] + params["b1"], 0.0)
    if "w3" in params:
        h = jnp.maximum(h @ params["w2"] + params["b2"], 0.0)
        return h @ params["w3"] + params["b3"]
    return h @ params["w2"] + params["b2"]


# ----------------------------------------------------------------------------
if __name__ == "__main__":
    key = jax.random.PRNGKey(0)
    kx, kp, kpd = jax.random.split(key, 3)

    B, dim, K = 8, 16, 32
    x = jax.random.normal(kx, (B, dim), jnp.float32)

    # Shallow path (dim -> K -> 1), exact-f32 compute path.
    params = init_net_eot_params(kp, dim, K, deeper=False)
    pp_f32 = prepare_net_eot_params(params, compute_dtype=jnp.float32)
    out = jax.block_until_ready(net_eot_forward(x, pp_f32))
    ref = net_eot_reference(x, params)
    assert out.shape == (B, 1)
    assert jnp.allclose(out, ref, atol=1e-3, rtol=1e-3), "shallow f32 mismatch"

    # Deeper path (dim -> 10K -> 10K -> 1), f32 compute path.
    params_d = init_net_eot_params(kpd, dim, K, deeper=True)
    ppd_f32 = prepare_net_eot_params(params_d, compute_dtype=jnp.float32)
    out_d = jax.block_until_ready(net_eot_forward(x, ppd_f32))
    ref_d = net_eot_reference(x, params_d)
    assert out_d.shape == (B, 1)
    assert jnp.allclose(out_d, ref_d, atol=1e-3, rtol=1e-3), "deeper f32 mismatch"

    # Default bf16 MXU-input path (f32 accumulation), checked vs f32 reference.
    ppd_bf16 = prepare_net_eot_params(params_d)  # compute_dtype=bfloat16
    out_bf = jax.block_until_ready(net_eot_forward(x, ppd_bf16))
    assert out_bf.shape == (B, 1)
    assert bool(jnp.isfinite(out_bf).all())
    assert jnp.allclose(out_bf, ref_d, atol=5e-2, rtol=5e-2), "deeper bf16 mismatch"

    print("KERNEL_OK")
</pallas_src>

<mosaic_0001>
module attributes {stable_mosaic.version = 11 : i64} {
  func.func @_net_eot_kernel(%arg0: i32, %arg1: memref<128x128xf32, #tpu.memory_space<vmem>>, %arg2: memref<128x128xf32, #tpu.memory_space<vmem>>, %arg3: memref<1x128xf32, #tpu.memory_space<vmem>>, %arg4: memref<128x128xf32, #tpu.memory_space<vmem>>, %arg5: memref<1x128xf32, #tpu.memory_space<vmem>>, %arg6: memref<128x128xf32, #tpu.memory_space<vmem>>) attributes {dimension_semantics = [#tpu.dimension_semantics<parallel>], iteration_bounds = array<i64: 1>, scalar_prefetch = 0 : i64, scratch_operands = 0 : i64, tpu.core_type = #tpu.core_type<tc>, window_params = [{transform_indices = @transform_0, window_bounds = array<i64: 128, 128>}, {pipeline_mode = #tpu.pipeline_mode<synchronous>, transform_indices = @transform_1, window_bounds = array<i64: 128, 128>}, {pipeline_mode = #tpu.pipeline_mode<synchronous>, transform_indices = @transform_2, window_bounds = array<i64: 1, 128>}, {pipeline_mode = #tpu.pipeline_mode<synchronous>, transform_indices = @transform_3, window_bounds = array<i64: 128, 128>}, {pipeline_mode = #tpu.pipeline_mode<synchronous>, transform_indices = @transform_4, window_bounds = array<i64: 1, 128>}, {transform_indices = @transform_5, window_bounds = array<i64: 128, 128>}]} {
    %c0 = arith.constant 0 : index
    %c0_0 = arith.constant 0 : index
    %0 = vector.load %arg1[%c0, %c0_0] : memref<128x128xf32, #tpu.memory_space<vmem>>, vector<128x128xf32>
    %c0_1 = arith.constant 0 : index
    %c0_2 = arith.constant 0 : index
    %1 = vector.load %arg2[%c0_1, %c0_2] : memref<128x128xf32, #tpu.memory_space<vmem>>, vector<128x128xf32>
    %cst = arith.constant dense<0.000000e+00> : vector<128x128xf32>
    %2 = tpu.matmul %0, %1, %cst {dimension_numbers = #tpu.dot_dimension_numbers<[1], [0], [0], [1], [0, 0, 1, 1], [], []>} : vector<128x128xf32>, vector<128x128xf32>, vector<128x128xf32> -> vector<128x128xf32>
    %c0_3 = arith.constant 0 : index
    %c0_4 = arith.constant 0 : index
    %3 = vector.load %arg3[%c0_3, %c0_4] : memref<1x128xf32, #tpu.memory_space<vmem>>, vector<1x128xf32>
    %4 = vector.broadcast %3 : vector<1x128xf32> to vector<128x128xf32>
    %5 = arith.addf %2, %4 : vector<128x128xf32>
    %cst_5 = arith.constant 0.000000e+00 : f32
    %6 = vector.broadcast %cst_5 : f32 to vector<128x128xf32>
    %7 = arith.maximumf %5, %6 : vector<128x128xf32>
    %c0_6 = arith.constant 0 : index
    %c0_7 = arith.constant 0 : index
    %8 = vector.load %arg4[%c0_6, %c0_7] : memref<128x128xf32, #tpu.memory_space<vmem>>, vector<128x128xf32>
    %cst_8 = arith.constant dense<0.000000e+00> : vector<128x128xf32>
    %9 = tpu.matmul %7, %8, %cst_8 {dimension_numbers = #tpu.dot_dimension_numbers<[1], [0], [0], [1], [0, 0, 1, 1], [], []>} : vector<128x128xf32>, vector<128x128xf32>, vector<128x128xf32> -> vector<128x128xf32>
    %c0_9 = arith.constant 0 : index
    %c0_10 = arith.constant 0 : index
    %10 = vector.load %arg5[%c0_9, %c0_10] : memref<1x128xf32, #tpu.memory_space<vmem>>, vector<1x128xf32>
    %11 = vector.broadcast %10 : vector<1x128xf32> to vector<128x128xf32>
    %12 = arith.addf %9, %11 : vector<128x128xf32>
    %c0_11 = arith.constant 0 : index
    %c0_12 = arith.constant 0 : index
    %13 = vector.load %arg6[%c0_11, %c0_12] : memref<128x128xf32, #tpu.memory_space<vmem>>, vector<128x128xf32>
    tpu.vector_store %arg6[%c0_11, %c0_12], %12 {strides = array<i32>} : memref<128x128xf32, #tpu.memory_space<vmem>>, vector<128x128xf32>,
    return
  }
  func.func @transform_0(%arg0: i32) -> (i32, i32) {
    %c0_i32 = arith.constant 0 : i32
    %c0_i32_0 = arith.constant 0 : i32
    return %arg0, %c0_i32 : i32, i32
  }
  func.func @transform_1(%arg0: i32) -> (i32, i32) {
    %c0_i32 = arith.constant 0 : i32
    %c0_i32_0 = arith.constant 0 : i32
    %c0_i32_1 = arith.constant 0 : i32
    return %c0_i32, %c0_i32_0 : i32, i32
  }
  func.func @transform_2(%arg0: i32) -> (i32, i32) {
    %c0_i32 = arith.constant 0 : i32
    %c0_i32_0 = arith.constant 0 : i32
    %c0_i32_1 = arith.constant 0 : i32
    return %c0_i32, %c0_i32_0 : i32, i32
  }
  func.func @transform_3(%arg0: i32) -> (i32, i32) {
    %c0_i32 = arith.constant 0 : i32
    %c0_i32_0 = arith.constant 0 : i32
    %c0_i32_1 = arith.constant 0 : i32
    return %c0_i32, %c0_i32_0 : i32, i32
  }
  func.func @transform_4(%arg0: i32) -> (i32, i32) {
    %c0_i32 = arith.constant 0 : i32
    %c0_i32_0 = arith.constant 0 : i32
    %c0_i32_1 = arith.constant 0 : i32
    return %c0_i32, %c0_i32_0 : i32, i32
  }
  func.func @transform_5(%arg0: i32) -> (i32, i32) {
    %c0_i32 = arith.constant 0 : i32
    %c0_i32_0 = arith.constant 0 : i32
    return %arg0, %c0_i32 : i32, i32
  }
}

</mosaic_0001>

<llo_original>
// kernel: net_eot_forward.1
$region0: #{net_eot_forward.1}
  #allocation0 [shape = 'u32[]', space=smem, size = 0x4, offset = 0x4, fixed_abs, tag = 'smem constant byte address 0x4 - core index']
  #allocation1 [shape = 'u32[144,128]{1,0:T(1,128)}', space=vmem, size = 0x12000, scoped, tag = 'internal scratch']
  %s0 = inlined_call_operand.vmem [shape: f32[128,128], index: 0, kind: input, shape index: {}]
  %s1 = inlined_call_operand.vmem [shape: f32[128,128], index: 1, kind: input, shape index: {}]
  %s2 = inlined_call_operand.vmem [shape: f32[1,128], index: 2, kind: input, shape index: {}]
  %s3 = inlined_call_operand.hbm [shape: f32[128,128], index: 3, kind: input, shape index: {}]
  %s4 = inlined_call_operand.vmem [shape: f32[1,128], index: 4, kind: input, shape index: {}]
  %s5 = inlined_call_operand.vmem [shape: f32[128,128], index: 5, kind: output, shape index: {}]
  %s6 = sld [smem:[#allocation0]]
  $region34: #{net_eot_forward.1} parent=0
    _
  %s8 = ssub.s32 1, %s6
  %s9 = scalar_select 0, %s8, %s6
  $region1: #{net_eot_forward.1} parent=0
    #allocation2 [shape = 'u8[65536]{0}', space=vmem, size = 0x10000, scoped, tag = 'input window, operand 3, single buffered']
    #allocation3 [shape = 's32[1]{0}', space=sflag, size = 0x4, scoped, tag = 'scoped memory for net_eot_forward.1']
    %10 = vsyncpa [#allocation3], 0
    // Predicated region
    $region2: #{net_eot_forward.1} parent=1 // pred_check
      _
    $region3: #{net_eot_forward.1} parent=1 // pred_check_branch
      %12 = sbr.rel (0) target = $region5
    $region4: #{net_eot_forward.1} parent=1 // pred_region
      _
    $region5: #{net_eot_forward.1} parent=1 // pred_fallthru
      _
    // Predicated region
    $region6: #{net_eot_forward.1} parent=1 // pred_check
      _
    $region7: #{net_eot_forward.1} parent=1 // pred_check_branch
      %14 = sbr.rel (0) target = $region9
    $region8: #{net_eot_forward.1} parent=1 // pred_region
      _
    $region9: #{net_eot_forward.1} parent=1 // pred_fallthru
      _
    // Predicated region
    $region10: #{net_eot_forward.1} parent=1 // pred_check
      _
    $region11: #{net_eot_forward.1} parent=1 // pred_check_branch
      %16 = sbr.rel (0) target = $region13
    $region12: #{net_eot_forward.1} parent=1 // pred_region
      _
    $region13: #{net_eot_forward.1} parent=1 // pred_fallthru
      _
    // Predicated region
    $region14: #{net_eot_forward.1} parent=1 // pred_check
      _
    $region15: #{net_eot_forward.1} parent=1 // pred_check_branch
      %18 = sbr.rel (0) target = $region17
    $region16: #{net_eot_forward.1} parent=1 // pred_region
      %s20 = ssub.s32 2048, 2048
      %21 = vsyncadd [#allocation3], %s20
      %s22 = sshll.u32 [#allocation2], 4
      %s23 = int_to_ptr.vmem [resolvable:$true] %s22
      %28 = dma.hbm_to_vmem [thread:$0]  %s3, 2048, %s23, [#allocation3], 128, 128, 8
    $region17: #{net_eot_forward.1} parent=1 // pred_fallthru
      _
    // Predicated region
    $region18: #{net_eot_forward.1} parent=1 // pred_check
      _
    $region19: #{net_eot_forward.1} parent=1 // pred_check_branch
      %30 = sbr.rel (0) target = $region21
    $region20: #{net_eot_forward.1} parent=1 // pred_region
      _
    $region21: #{net_eot_forward.1} parent=1 // pred_fallthru
      _
    // Predicated region
    $region22: #{net_eot_forward.1} parent=1 // pred_check
      _
    $region23: #{net_eot_forward.1} parent=1 // pred_check_branch
      %32 = sbr.rel (0) target = $region25
    $region24: #{net_eot_forward.1} parent=1 // pred_region
      %33 = dma.done [#allocation3], 2048
    $region25: #{net_eot_forward.1} parent=1 // pred_fallthru
      _
    %v34 = vld [vmem:[%s0] sm:$0xff]
    %v35 = vld [vmem:[%s0 + $0x8] sm:$0xff]
    %v36 = vld [vmem:[%s0 + $0x10] sm:$0xff]
    %v37 = vld [vmem:[%s0 + $0x18] sm:$0xff]
    %v38 = vld [vmem:[%s0 + $0x20] sm:$0xff]
    %v39 = vld [vmem:[%s0 + $0x28] sm:$0xff]
    %v40 = vld [vmem:[%s0 + $0x30] sm:$0xff]
    %v41 = vld [vmem:[%s0 + $0x38] sm:$0xff]
    %v42 = vld [vmem:[%s0 + $0x40] sm:$0xff]
    %v43 = vld [vmem:[%s0 + $0x48] sm:$0xff]
    %v44 = vld [vmem:[%s0 + $0x50] sm:$0xff]
    %v45 = vld [vmem:[%s0 + $0x58] sm:$0xff]
    %v46 = vld [vmem:[%s0 + $0x60] sm:$0xff]
    %v47 = vld [vmem:[%s0 + $0x68] sm:$0xff]
    %v48 = vld [vmem:[%s0 + $0x70] sm:$0xff]
    %v49 = vld [vmem:[%s0 + $0x78] sm:$0xff]
    %v50 = vld [vmem:[%s1] sm:$0xff]
    %v51 = vld [vmem:[%s1 + $0x8] sm:$0xff]
    %v52 = vld [vmem:[%s1 + $0x10] sm:$0xff]
    %v53 = vld [vmem:[%s1 + $0x18] sm:$0xff]
    %v54 = vld [vmem:[%s1 + $0x20] sm:$0xff]
    %v55 = vld [vmem:[%s1 + $0x28] sm:$0xff]
    %v56 = vld [vmem:[%s1 + $0x30] sm:$0xff]
    %v57 = vld [vmem:[%s1 + $0x38] sm:$0xff]
    %v58 = vld [vmem:[%s1 + $0x40] sm:$0xff]
    %v59 = vld [vmem:[%s1 + $0x48] sm:$0xff]
    %v60 = vld [vmem:[%s1 + $0x50] sm:$0xff]
    %v61 = vld [vmem:[%s1 + $0x58] sm:$0xff]
    %v62 = vld [vmem:[%s1 + $0x60] sm:$0xff]
    %v63 = vld [vmem:[%s1 + $0x68] sm:$0xff]
    %v64 = vld [vmem:[%s1 + $0x70] sm:$0xff]
    %v65 = vld [vmem:[%s1 + $0x78] sm:$0xff]
    %v66 = vld [vmem:[%s2] sm:$0x1]
    %v68 = vlaneseq
    %v69 = vshrl.u32 %v68, 7
    %v70 = vsub.s32 0, %v69
    %v71 = vrot.slane %v66, %v70
    %73 = vmatprep.subr.mxu0 0.0
    %74 = vmatpush1.msra.mxu0 %v65
    %75 = vmatprep.subr.mxu0 0.0
    %76 = vmatpush1.msra.mxu0 %v64
    %77 = vmatprep.subr.mxu0 0.0
    %78 = vmatpush1.msra.mxu0 %v63
    %79 = vmatprep.subr.mxu0 0.0
    %80 = vmatpush1.msra.mxu0 %v62
    %81 = vmatprep.subr.mxu0 0.0
    %82 = vmatpush1.msra.mxu0 %v61
    %83 = vmatprep.subr.mxu0 0.0
    %84 = vmatpush1.msra.mxu0 %v60
    %85 = vmatprep.subr.mxu0 0.0
    %86 = vmatpush1.msra.mxu0 %v59
    %87 = vmatprep.subr.mxu0 0.0
    %88 = vmatpush1.msra.mxu0 %v58
    %89 = vmatprep.subr.mxu0 0.0
    %90 = vmatpush1.msra.mxu0 %v57
    %91 = vmatprep.subr.mxu0 0.0
    %92 = vmatpush1.msra.mxu0 %v56
    %93 = vmatprep.subr.mxu0 0.0
    %94 = vmatpush1.msra.mxu0 %v55
    %95 = vmatprep.subr.mxu0 0.0
    %96 = vmatpush1.msra.mxu0 %v54
    %97 = vmatprep.subr.mxu0 0.0
    %98 = vmatpush1.msra.mxu0 %v53
    %99 = vmatprep.subr.mxu0 0.0
    %100 = vmatpush1.msra.mxu0 %v52
    %101 = vmatprep.subr.mxu0 0.0
    %102 = vmatpush1.msra.mxu0 %v51
    %103 = vmatprep.subr.mxu0 0.0
    %104 = vmatpush1.msra.mxu0 %v50
    %105 = vmatprep.subr.mxu0 0.0
    %106 = vmatpush2.msra.mxu0 0.0
    %107 = vmatprep.subr.mxu0 0.0
    %108 = vmatpush2.msra.mxu0 0.0
    %109 = vmatprep.subr.mxu0 0.0
    %110 = vmatpush2.msra.mxu0 0.0
    %111 = vmatprep.subr.mxu0 0.0
    %112 = vmatpush2.msra.mxu0 0.0
    %113 = vmatprep.subr.mxu0 0.0
    %114 = vmatpush2.msra.mxu0 0.0
    %115 = vmatprep.subr.mxu0 0.0
    %116 = vmatpush2.msra.mxu0 0.0
    %117 = vmatprep.subr.mxu0 0.0
    %118 = vmatpush2.msra.mxu0 0.0
    %119 = vmatprep.subr.mxu0 0.0
    %120 = vmatpush2.msra.mxu0 0.0
    %121 = vmatprep.subr.mxu0 0.0
    %122 = vmatpush2.msra.mxu0 0.0
    %123 = vmatprep.subr.mxu0 0.0
    %124 = vmatpush2.msra.mxu0 0.0
    %125 = vmatprep.subr.mxu0 0.0
    %126 = vmatpush2.msra.mxu0 0.0
    %127 = vmatprep.subr.mxu0 0.0
    %128 = vmatpush2.msra.mxu0 0.0
    %129 = vmatprep.subr.mxu0 0.0
    %130 = vmatpush2.msra.mxu0 0.0
    %131 = vmatprep.subr.mxu0 0.0
    %132 = vmatpush2.msra.mxu0 0.0
    %133 = vmatprep.subr.mxu0 0.0
    %134 = vmatpush2.msra.mxu0 0.0
    %135 = vmatprep.subr.mxu0 0.0
    %136 = vmatpush2.msra.mxu0 0.0
    %137 = vmatprep.mubr.f32.mxu0 0.0
    %138 = vmatmul.mubr.f32.gmra.mxu0 %v34
    %v139 = vpop.f32.mrf.mxu0
    %v140 = vadd.f32 %v71, %v139
    %v141 = vpop.f32.mrf.mxu0
    %142 = vmatprep.mubr.f32.mxu0 0.0
    %143 = vmatmul.mubr.f32.gmra.mxu0 %v35
    %v144 = vpop.f32.mrf.mxu0
    %v145 = vadd.f32 %v71, %v144
    %v146 = vpop.f32.mrf.mxu0
    %147 = vmatprep.mubr.f32.mxu0 0.0
    %148 = vmatmul.mubr.f32.gmra.mxu0 %v36
    %v149 = vpop.f32.mrf.mxu0
    %v150 = vadd.f32 %v71, %v149
    %v151 = vpop.f32.mrf.mxu0
    %152 = vmatprep.mubr.f32.mxu0 0.0
    %153 = vmatmul.mubr.f32.gmra.mxu0 %v37
    %v154 = vpop.f32.mrf.mxu0
    %v155 = vadd.f32 %v71, %v154
    %v156 = vpop.f32.mrf.mxu0
    %157 = vmatprep.mubr.f32.mxu0 0.0
    %158 = vmatmul.mubr.f32.gmra.mxu0 %v38
    %v159 = vpop.f32.mrf.mxu0
    %v160 = vadd.f32 %v71, %v159
    %v161 = vpop.f32.mrf.mxu0
    %162 = vmatprep.mubr.f32.mxu0 0.0
    %163 = vmatmul.mubr.f32.gmra.mxu0 %v39
    %v164 = vpop.f32.mrf.mxu0
    %v165 = vadd.f32 %v71, %v164
    %v166 = vpop.f32.mrf.mxu0
    %167 = vmatprep.mubr.f32.mxu0 0.0
    %168 = vmatmul.mubr.f32.gmra.mxu0 %v40
    %v169 = vpop.f32.mrf.mxu0
    %v170 = vadd.f32 %v71, %v169
    %v171 = vpop.f32.mrf.mxu0
    %172 = vmatprep.mubr.f32.mxu0 0.0
    %173 = vmatmul.mubr.f32.gmra.mxu0 %v41
    %v174 = vpop.f32.mrf.mxu0
    %v175 = vadd.f32 %v71, %v174
    %v176 = vpop.f32.mrf.mxu0
    %177 = vmatprep.mubr.f32.mxu0 0.0
    %178 = vmatmul.mubr.f32.gmra.mxu0 %v42
    %v179 = vpop.f32.mrf.mxu0
    %v180 = vadd.f32 %v71, %v179
    %v181 = vpop.f32.mrf.mxu0
    %182 = vmatprep.mubr.f32.mxu0 0.0
    %183 = vmatmul.mubr.f32.gmra.mxu0 %v43
    %v184 = vpop.f32.mrf.mxu0
    %v185 = vadd.f32 %v71, %v184
    %v186 = vpop.f32.mrf.mxu0
    %187 = vmatprep.mubr.f32.mxu0 0.0
    %188 = vmatmul.mubr.f32.gmra.mxu0 %v44
    %v189 = vpop.f32.mrf.mxu0
    %v190 = vadd.f32 %v71, %v189
    %v191 = vpop.f32.mrf.mxu0
    %192 = vmatprep.mubr.f32.mxu0 0.0
    %193 = vmatmul.mubr.f32.gmra.mxu0 %v45
    %v194 = vpop.f32.mrf.mxu0
    %v195 = vadd.f32 %v71, %v194
    %v196 = vpop.f32.mrf.mxu0
    %197 = vmatprep.mubr.f32.mxu0 0.0
    %198 = vmatmul.mubr.f32.gmra.mxu0 %v46
    %v199 = vpop.f32.mrf.mxu0
    %v200 = vadd.f32 %v71, %v199
    %v201 = vpop.f32.mrf.mxu0
    %202 = vmatprep.mubr.f32.mxu0 0.0
    %203 = vmatmul.mubr.f32.gmra.mxu0 %v47
    %v204 = vpop.f32.mrf.mxu0
    %v205 = vadd.f32 %v71, %v204
    %v206 = vpop.f32.mrf.mxu0
    %207 = vmatprep.mubr.f32.mxu0 0.0
    %208 = vmatmul.mubr.f32.gmra.mxu0 %v48
    %v209 = vpop.f32.mrf.mxu0
    %v210 = vadd.f32 %v71, %v209
    %v211 = vpop.f32.mrf.mxu0
    %212 = vmatprep.mubr.f32.mxu0 0.0
    %213 = vmatmul.mubr.f32.gmra.mxu0 %v49
    %v214 = vpop.f32.mrf.mxu0
    %v215 = vadd.f32 %v71, %v214
    %v216 = vpop.f32.mrf.mxu0
    %217 = vdwg.mxu0
    %v218 = vmax.f32 %v140, 0.0
    %v219 = vmax.f32 %v145, 0.0
    %v220 = vmax.f32 %v150, 0.0
    %v221 = vmax.f32 %v155, 0.0
    %v222 = vmax.f32 %v160, 0.0
    %v223 = vmax.f32 %v165, 0.0
    %v224 = vmax.f32 %v170, 0.0
    %v225 = vmax.f32 %v175, 0.0
    %v226 = vmax.f32 %v180, 0.0
    %v227 = vmax.f32 %v185, 0.0
    %v228 = vmax.f32 %v190, 0.0
    %v229 = vmax.f32 %v195, 0.0
    %v230 = vmax.f32 %v200, 0.0
    %v231 = vmax.f32 %v205, 0.0
    %v232 = vmax.f32 %v210, 0.0
    %v233 = vmax.f32 %v215, 0.0
    %v234 = vld [vmem:[#allocation2] sm:$0xff]
    %v235 = vld [vmem:[#allocation2 + $0x8] sm:$0xff]
    %v236 = vld [vmem:[#allocation2 + $0x10] sm:$0xff]
    %v237 = vld [vmem:[#allocation2 + $0x18] sm:$0xff]
    %v238 = vld [vmem:[#allocation2 + $0x20] sm:$0xff]
    %v239 = vld [vmem:[#allocation2 + $0x28] sm:$0xff]
    %v240 = vld [vmem:[#allocation2 + $0x30] sm:$0xff]
    %v241 = vld [vmem:[#allocation2 + $0x38] sm:$0xff]
    %v242 = vld [vmem:[#allocation2 + $0x40] sm:$0xff]
    %v243 = vld [vmem:[#allocation2 + $0x48] sm:$0xff]
    %v244 = vld [vmem:[#allocation2 + $0x50] sm:$0xff]
    %v245 = vld [vmem:[#allocation2 + $0x58] sm:$0xff]
    %v246 = vld [vmem:[#allocation2 + $0x60] sm:$0xff]
    %v247 = vld [vmem:[#allocation2 + $0x68] sm:$0xff]
    %v248 = vld [vmem:[#allocation2 + $0x70] sm:$0xff]
    %v249 = vld [vmem:[#allocation2 + $0x78] sm:$0xff]
    %v250 = vld [vmem:[%s4] sm:$0x1]
    %v252 = vlaneseq
    %v253 = vshrl.u32 %v252, 7
    %v254 = vsub.s32 0, %v253
    %v255 = vrot.slane %v250, %v254
    %257 = vmatprep.subr.mxu0 0.0
    %258 = vmatpush1.msra.mxu0 %v249
    %259 = vmatprep.subr.mxu0 0.0
    %260 = vmatpush1.msra.mxu0 %v248
    %261 = vmatprep.subr.mxu0 0.0
    %262 = vmatpush1.msra.mxu0 %v247
    %263 = vmatprep.subr.mxu0 0.0
    %264 = vmatpush1.msra.mxu0 %v246
    %265 = vmatprep.subr.mxu0 0.0
    %266 = vmatpush1.msra.mxu0 %v245
    %267 = vmatprep.subr.mxu0 0.0
    %268 = vmatpush1.msra.mxu0 %v244
    %269 = vmatprep.subr.mxu0 0.0
    %270 = vmatpush1.msra.mxu0 %v243
    %271 = vmatprep.subr.mxu0 0.0
    %272 = vmatpush1.msra.mxu0 %v242
    %273 = vmatprep.subr.mxu0 0.0
    %274 = vmatpush1.msra.mxu0 %v241
    %275 = vmatprep.subr.mxu0 0.0
    %276 = vmatpush1.msra.mxu0 %v240
    %277 = vmatprep.subr.mxu0 0.0
    %278 = vmatpush1.msra.mxu0 %v239
    %279 = vmatprep.subr.mxu0 0.0
    %280 = vmatpush1.msra.mxu0 %v238
    %281 = vmatprep.subr.mxu0 0.0
    %282 = vmatpush1.msra.mxu0 %v237
    %283 = vmatprep.subr.mxu0 0.0
    %284 = vmatpush1.msra.mxu0 %v236
    %285 = vmatprep.subr.mxu0 0.0
    %286 = vmatpush1.msra.mxu0 %v235
    %287 = vmatprep.subr.mxu0 0.0
    %288 = vmatpush1.msra.mxu0 %v234
    %289 = vmatprep.subr.mxu0 0.0
    %290 = vmatpush2.msra.mxu0 0.0
    %291 = vmatprep.subr.mxu0 0.0
    %292 = vmatpush2.msra.mxu0 0.0
    %293 = vmatprep.subr.mxu0 0.0
    %294 = vmatpush2.msra.mxu0 0.0
    %295 = vmatprep.subr.mxu0 0.0
    %296 = vmatpush2.msra.mxu0 0.0
    %297 = vmatprep.subr.mxu0 0.0
    %298 = vmatpush2.msra.mxu0 0.0
    %299 = vmatprep.subr.mxu0 0.0
    %300 = vmatpush2.msra.mxu0 0.0
    %301 = vmatprep.subr.mxu0 0.0
    %302 = vmatpush2.msra.mxu0 0.0
    %303 = vmatprep.subr.mxu0 0.0
    %304 = vmatpush2.msra.mxu0 0.0
    %305 = vmatprep.subr.mxu0 0.0
    %306 = vmatpush2.msra.mxu0 0.0
    %307 = vmatprep.subr.mxu0 0.0
    %308 = vmatpush2.msra.mxu0 0.0
    %309 = vmatprep.subr.mxu0 0.0
    %310 = vmatpush2.msra.mxu0 0.0
    %311 = vmatprep.subr.mxu0 0.0
    %312 = vmatpush2.msra.mxu0 0.0
    %313 = vmatprep.subr.mxu0 0.0
    %314 = vmatpush2.msra.mxu0 0.0
    %315 = vmatprep.subr.mxu0 0.0
    %316 = vmatpush2.msra.mxu0 0.0
    %317 = vmatprep.subr.mxu0 0.0
    %318 = vmatpush2.msra.mxu0 0.0
    %319 = vmatprep.subr.mxu0 0.0
    %320 = vmatpush2.msra.mxu0 0.0
    %321 = vmatprep.mubr.f32.mxu0 0.0
    %322 = vmatmul.mubr.f32.gmra.mxu0 %v218
    %v323 = vpop.f32.mrf.mxu0
    %v324 = vadd.f32 %v255, %v323
    %v325 = vpop.f32.mrf.mxu0
    %326 = vmatprep.mubr.f32.mxu0 0.0
    %327 = vmatmul.mubr.f32.gmra.mxu0 %v219
    %v328 = vpop.f32.mrf.mxu0
    %v329 = vadd.f32 %v255, %v328
    %v330 = vpop.f32.mrf.mxu0
    %331 = vmatprep.mubr.f32.mxu0 0.0
    %332 = vmatmul.mubr.f32.gmra.mxu0 %v220
    %v333 = vpop.f32.mrf.mxu0
    %v334 = vadd.f32 %v255, %v333
    %v335 = vpop.f32.mrf.mxu0
    %336 = vmatprep.mubr.f32.mxu0 0.0
    %337 = vmatmul.mubr.f32.gmra.mxu0 %v221
    %v338 = vpop.f32.mrf.mxu0
    %v339 = vadd.f32 %v255, %v338
    %v340 = vpop.f32.mrf.mxu0
    %341 = vmatprep.mubr.f32.mxu0 0.0
    %342 = vmatmul.mubr.f32.gmra.mxu0 %v222
    %v343 = vpop.f32.mrf.mxu0
    %v344 = vadd.f32 %v255, %v343
    %v345 = vpop.f32.mrf.mxu0
    %346 = vmatprep.mubr.f32.mxu0 0.0
    %347 = vmatmul.mubr.f32.gmra.mxu0 %v223
    %v348 = vpop.f32.mrf.mxu0
    %v349 = vadd.f32 %v255, %v348
    %v350 = vpop.f32.mrf.mxu0
    %351 = vmatprep.mubr.f32.mxu0 0.0
    %352 = vmatmul.mubr.f32.gmra.mxu0 %v224
    %v353 = vpop.f32.mrf.mxu0
    %v354 = vadd.f32 %v255, %v353
    %v355 = vpop.f32.mrf.mxu0
    %356 = vmatprep.mubr.f32.mxu0 0.0
    %357 = vmatmul.mubr.f32.gmra.mxu0 %v225
    %v358 = vpop.f32.mrf.mxu0
    %v359 = vadd.f32 %v255, %v358
    %v360 = vpop.f32.mrf.mxu0
    %361 = vmatprep.mubr.f32.mxu0 0.0
    %362 = vmatmul.mubr.f32.gmra.mxu0 %v226
    %v363 = vpop.f32.mrf.mxu0
    %v364 = vadd.f32 %v255, %v363
    %v365 = vpop.f32.mrf.mxu0
    %366 = vmatprep.mubr.f32.mxu0 0.0
    %367 = vmatmul.mubr.f32.gmra.mxu0 %v227
    %v368 = vpop.f32.mrf.mxu0
    %v369 = vadd.f32 %v255, %v368
    %v370 = vpop.f32.mrf.mxu0
    %371 = vmatprep.mubr.f32.mxu0 0.0
    %372 = vmatmul.mubr.f32.gmra.mxu0 %v228
    %v373 = vpop.f32.mrf.mxu0
    %v374 = vadd.f32 %v255, %v373
    %v375 = vpop.f32.mrf.mxu0
    %376 = vmatprep.mubr.f32.mxu0 0.0
    %377 = vmatmul.mubr.f32.gmra.mxu0 %v229
    %v378 = vpop.f32.mrf.mxu0
    %v379 = vadd.f32 %v255, %v378
    %v380 = vpop.f32.mrf.mxu0
    %381 = vmatprep.mubr.f32.mxu0 0.0
    %382 = vmatmul.mubr.f32.gmra.mxu0 %v230
    %v383 = vpop.f32.mrf.mxu0
    %v384 = vadd.f32 %v255, %v383
    %v385 = vpop.f32.mrf.mxu0
    %386 = vmatprep.mubr.f32.mxu0 0.0
    %387 = vmatmul.mubr.f32.gmra.mxu0 %v231
    %v388 = vpop.f32.mrf.mxu0
    %v389 = vadd.f32 %v255, %v388
    %v390 = vpop.f32.mrf.mxu0
    %391 = vmatprep.mubr.f32.mxu0 0.0
    %392 = vmatmul.mubr.f32.gmra.mxu0 %v232
    %v393 = vpop.f32.mrf.mxu0
    %v394 = vadd.f32 %v255, %v393
    %v395 = vpop.f32.mrf.mxu0
    %396 = vmatprep.mubr.f32.mxu0 0.0
    %397 = vmatmul.mubr.f32.gmra.mxu0 %v233
    %v398 = vpop.f32.mrf.mxu0
    %v399 = vadd.f32 %v255, %v398
    %v400 = vpop.f32.mrf.mxu0
    %401 = vdwg.mxu0
    %402 = vst [vmem:[%s5] sm:$0xff] %v324
    %403 = vst [vmem:[%s5 + $0x8] sm:$0xff] %v329
    %404 = vst [vmem:[%s5 + $0x10] sm:$0xff] %v334
    %405 = vst [vmem:[%s5 + $0x18] sm:$0xff] %v339
    %406 = vst [vmem:[%s5 + $0x20] sm:$0xff] %v344
    %407 = vst [vmem:[%s5 + $0x28] sm:$0xff] %v349
    %408 = vst [vmem:[%s5 + $0x30] sm:$0xff] %v354
    %409 = vst [vmem:[%s5 + $0x38] sm:$0xff] %v359
    %410 = vst [vmem:[%s5 + $0x40] sm:$0xff] %v364
    %411 = vst [vmem:[%s5 + $0x48] sm:$0xff] %v369
    %412 = vst [vmem:[%s5 + $0x50] sm:$0xff] %v374
    %413 = vst [vmem:[%s5 + $0x58] sm:$0xff] %v379
    %414 = vst [vmem:[%s5 + $0x60] sm:$0xff] %v384
    %415 = vst [vmem:[%s5 + $0x68] sm:$0xff] %v389
    %416 = vst [vmem:[%s5 + $0x70] sm:$0xff] %v394
    %417 = vst [vmem:[%s5 + $0x78] sm:$0xff] %v399
    // Predicated region
    $region26: #{net_eot_forward.1} parent=1 // pred_check
      _
    $region27: #{net_eot_forward.1} parent=1 // pred_check_branch
      %419 = sbr.rel (0) target = $region29
    $region28: #{net_eot_forward.1} parent=1 // pred_region
      _
    $region29: #{net_eot_forward.1} parent=1 // pred_fallthru
      _
    // Predicated region
    $region30: #{net_eot_forward.1} parent=1 // pred_check
      _
    $region31: #{net_eot_forward.1} parent=1 // pred_check_branch
      %421 = sbr.rel (0) target = $region33
    $region32: #{net_eot_forward.1} parent=1 // pred_region
      _
    $region33: #{net_eot_forward.1} parent=1 // pred_fallthru
      _
    %422 = vsyncpa [#allocation3], 1

</llo_original>
